<compile_context>
chip_gen: v7x
topology: tpu7x:2x2x1
jax: 0.10.0
libtpu: 0.0.40
codegen_flags: <defaults>
</compile_context>

<pallas_src>
import jax
import jax.numpy as jnp
from jax.experimental import pallas as pl
from jax.experimental.pallas import tpu as pltpu


def _merge2_kernel(w_ref, x1_ref, x2_ref, gt_ref, bd_ref, o_ref):
    """Fused: x1 + x2 * (1 + sigmoid(gt)*w1 + bd*w2) on one VMEM tile."""
    w1 = w_ref[0]                              # SMEM scalar reads
    w2 = w_ref[1]
    # (1, Cg, T) / (1, Cb, T): tiny when Cg == Cb == 1, broadcasts over C.
    coeff = 1.0 + jax.nn.sigmoid(gt_ref[...]) * w1 + bd_ref[...] * w2
    res = x1_ref[...] + x2_ref[...] * coeff    # one full-C mul + one full-C add
    o_ref[...] = res.astype(o_ref.dtype)


def _pick_hw_tile(hw, c, itemsize):
    """Largest lane tile (multiple of 128) keeping a (1, C, T) block ~2 MiB."""
    budget_elems = (2 * 1024 * 1024) // max(itemsize, 1)
    t = budget_elems // max(c, 1)
    t = max(128, (t // 128) * 128)
    if hw <= t:
        return hw                              # single full-width block
    return t                                   # multiple of 128 -> valid tile


@jax.jit
def merge2(x1, x2, gt_pre, boundary_pre, w1, w2):
    """Pallas TPU implementation of PyTorch Merge2.forward (NCHW)."""
    N, C, H, W = x1.shape
    HW = H * W
    Cg = gt_pre.shape[1]
    Cb = boundary_pre.shape[1]

    # Lane-dense 3-D views.
    x1_3 = x1.reshape(N, C, HW)
    x2_3 = x2.reshape(N, C, HW)
    gt_3 = gt_pre.reshape(N, Cg, HW)
    bd_3 = boundary_pre.reshape(N, Cb, HW)
    w = jnp.stack([jnp.asarray(w1, jnp.float32), jnp.asarray(w2, jnp.float32)])

    t_hw = _pick_hw_tile(HW, C, jnp.dtype(x1.dtype).itemsize)
    grid = (N, pl.cdiv(HW, t_hw))

    def tile_map(n, h):
        return (n, 0, h)

    out = pl.pallas_call(
        _merge2_kernel,
        out_shape=jax.ShapeDtypeStruct((N, C, HW), x1.dtype),
        grid=grid,
        in_specs=[
            pl.BlockSpec(memory_space=pltpu.MemorySpace.SMEM),  # [w1, w2]
            pl.BlockSpec((1, C, t_hw), tile_map),
            pl.BlockSpec((1, C, t_hw), tile_map),
            pl.BlockSpec((1, Cg, t_hw), tile_map),
            pl.BlockSpec((1, Cb, t_hw), tile_map),
        ],
        out_specs=pl.BlockSpec((1, C, t_hw), tile_map),
        compiler_params=pltpu.CompilerParams(
            dimension_semantics=("parallel", "parallel")),
    )(w, x1_3, x2_3, gt_3, bd_3)
    return out.reshape(N, C, H, W)


if __name__ == "__main__":
    key = jax.random.PRNGKey(0)
    k1, k2, k3, k4 = jax.random.split(key, 4)

    # Shapes as Merge2 is used inside LBUNet: full-channel skip tensors,
    # 1-channel gate / boundary maps, scalar weights.
    N, C, H, W = 2, 4, 16, 16
    x1 = jax.random.normal(k1, (N, C, H, W), jnp.float32)
    x2 = jax.random.normal(k2, (N, C, H, W), jnp.float32)
    gt_pre = jax.random.normal(k3, (N, 1, H, W), jnp.float32)
    boundary_pre = jax.random.normal(k4, (N, 1, H, W), jnp.float32)
    w1, w2 = 0.3, 0.1

    out = merge2(x1, x2, gt_pre, boundary_pre, w1, w2)
    out = jax.block_until_ready(out)

    ref = x1 + x2 + jax.nn.sigmoid(gt_pre) * x2 * w1 + boundary_pre * x2 * w2
    assert out.shape == (N, C, H, W)
    assert jnp.allclose(out, ref, atol=1e-5, rtol=1e-5)

    print("KERNEL_OK")
</pallas_src>

<mosaic_0001>
module attributes {stable_mosaic.version = 11 : i64} {
  func.func @_merge2_kernel(%arg0: i32, %arg1: i32, %arg2: memref<2xf32, #tpu.memory_space<smem>>, %arg3: memref<1x4x256xf32, #tpu.memory_space<vmem>>, %arg4: memref<1x4x256xf32, #tpu.memory_space<vmem>>, %arg5: memref<1x1x256xf32, #tpu.memory_space<vmem>>, %arg6: memref<1x1x256xf32, #tpu.memory_space<vmem>>, %arg7: memref<1x4x256xf32, #tpu.memory_space<vmem>>) attributes {dimension_semantics = [#tpu.dimension_semantics<parallel>, #tpu.dimension_semantics<parallel>], iteration_bounds = array<i64: 2, 1>, scalar_prefetch = 0 : i64, scratch_operands = 0 : i64, tpu.core_type = #tpu.core_type<tc>, window_params = [{transform_indices = @transform_0, window_bounds = array<i64: 2>}, {transform_indices = @transform_1, window_bounds = array<i64: 1, 4, 256>}, {transform_indices = @transform_2, window_bounds = array<i64: 1, 4, 256>}, {transform_indices = @transform_3, window_bounds = array<i64: 1, 1, 256>}, {transform_indices = @transform_4, window_bounds = array<i64: 1, 1, 256>}, {transform_indices = @transform_5, window_bounds = array<i64: 1, 4, 256>}]} {
    %c0 = arith.constant 0 : index
    %0 = memref.load %arg2[%c0] : memref<2xf32, #tpu.memory_space<smem>>
    %c1 = arith.constant 1 : index
    %1 = memref.load %arg2[%c1] : memref<2xf32, #tpu.memory_space<smem>>
    %c0_0 = arith.constant 0 : index
    %c0_1 = arith.constant 0 : index
    %c0_2 = arith.constant 0 : index
    %2 = vector.load %arg5[%c0_0, %c0_1, %c0_2] : memref<1x1x256xf32, #tpu.memory_space<vmem>>, vector<1x1x256xf32>
    %3 = arith.negf %2 : vector<1x1x256xf32>
    %4 = math.exp %3 : vector<1x1x256xf32>
    %cst = arith.constant 1.000000e+00 : f32
    %5 = vector.broadcast %cst : f32 to vector<1x1x256xf32>
    %6 = arith.addf %5, %4 : vector<1x1x256xf32>
    %7 = arith.divf %5, %6 : vector<1x1x256xf32>
    %8 = vector.broadcast %0 : f32 to vector<1x1x256xf32>
    %9 = arith.mulf %7, %8 : vector<1x1x256xf32>
    %cst_3 = arith.constant 1.000000e+00 : f32
    %10 = vector.broadcast %cst_3 : f32 to vector<1x1x256xf32>
    %11 = arith.addf %10, %9 : vector<1x1x256xf32>
    %c0_4 = arith.constant 0 : index
    %c0_5 = arith.constant 0 : index
    %c0_6 = arith.constant 0 : index
    %12 = vector.load %arg6[%c0_4, %c0_5, %c0_6] : memref<1x1x256xf32, #tpu.memory_space<vmem>>, vector<1x1x256xf32>
    %13 = vector.broadcast %1 : f32 to vector<1x1x256xf32>
    %14 = arith.mulf %12, %13 : vector<1x1x256xf32>
    %15 = arith.addf %11, %14 : vector<1x1x256xf32>
    %c0_7 = arith.constant 0 : index
    %c0_8 = arith.constant 0 : index
    %c0_9 = arith.constant 0 : index
    %16 = vector.load %arg3[%c0_7, %c0_8, %c0_9] : memref<1x4x256xf32, #tpu.memory_space<vmem>>, vector<1x4x256xf32>
    %c0_10 = arith.constant 0 : index
    %c0_11 = arith.constant 0 : index
    %c0_12 = arith.constant 0 : index
    %17 = vector.load %arg4[%c0_10, %c0_11, %c0_12] : memref<1x4x256xf32, #tpu.memory_space<vmem>>, vector<1x4x256xf32>
    %18 = vector.broadcast %15 : vector<1x1x256xf32> to vector<1x4x256xf32>
    %19 = arith.mulf %17, %18 : vector<1x4x256xf32>
    %20 = arith.addf %16, %19 : vector<1x4x256xf32>
    %c0_13 = arith.constant 0 : index
    %c0_14 = arith.constant 0 : index
    %c0_15 = arith.constant 0 : index
    %21 = vector.load %arg7[%c0_13, %c0_14, %c0_15] : memref<1x4x256xf32, #tpu.memory_space<vmem>>, vector<1x4x256xf32>
    tpu.vector_store %arg7[%c0_13, %c0_14, %c0_15], %20 {strides = array<i32>} : memref<1x4x256xf32, #tpu.memory_space<vmem>>, vector<1x4x256xf32>,
    return
  }
  func.func @transform_0(%arg0: i32, %arg1: i32) -> i32 {
    %c0_i32 = arith.constant 0 : i32
    %c0_i32_0 = arith.constant 0 : i32
    return %c0_i32 : i32
  }
  func.func @transform_1(%arg0: i32, %arg1: i32) -> (i32, i32, i32) {
    %c0_i32 = arith.constant 0 : i32
    %c0_i32_0 = arith.constant 0 : i32
    return %arg0, %c0_i32, %arg1 : i32, i32, i32
  }
  func.func @transform_2(%arg0: i32, %arg1: i32) -> (i32, i32, i32) {
    %c0_i32 = arith.constant 0 : i32
    %c0_i32_0 = arith.constant 0 : i32
    return %arg0, %c0_i32, %arg1 : i32, i32, i32
  }
  func.func @transform_3(%arg0: i32, %arg1: i32) -> (i32, i32, i32) {
    %c0_i32 = arith.constant 0 : i32
    %c0_i32_0 = arith.constant 0 : i32
    return %arg0, %c0_i32, %arg1 : i32, i32, i32
  }
  func.func @transform_4(%arg0: i32, %arg1: i32) -> (i32, i32, i32) {
    %c0_i32 = arith.constant 0 : i32
    %c0_i32_0 = arith.constant 0 : i32
    return %arg0, %c0_i32, %arg1 : i32, i32, i32
  }
  func.func @transform_5(%arg0: i32, %arg1: i32) -> (i32, i32, i32) {
    %c0_i32 = arith.constant 0 : i32
    %c0_i32_0 = arith.constant 0 : i32
    return %arg0, %c0_i32, %arg1 : i32, i32, i32
  }
}

</mosaic_0001>

<llo_original>
// kernel: merge2.1
$region0: #{merge2.1}
  #allocation0 [shape = 'u32[]', space=smem, size = 0x4, offset = 0x4, fixed_abs, tag = 'smem constant byte address 0x4 - core index']
  #allocation1 [shape = 'u32[144,128]{1,0:T(1,128)}', space=vmem, size = 0x12000, scoped, tag = 'internal scratch']
  %s0 = inlined_call_operand.vmem [shape: f32[2], index: 0, kind: input, shape index: {}]
  %s1 = inlined_call_operand.vmem [shape: f32[2,4,256], index: 1, kind: input, shape index: {}]
  %s2 = inlined_call_operand.vmem [shape: f32[2,4,256], index: 2, kind: input, shape index: {}]
  %s3 = inlined_call_operand.vmem [shape: f32[2,1,256], index: 3, kind: input, shape index: {}]
  %s4 = inlined_call_operand.vmem [shape: f32[2,1,256], index: 4, kind: input, shape index: {}]
  %s5 = inlined_call_operand.vmem [shape: f32[2,4,256], index: 5, kind: output, shape index: {}]
  %s6 = sld [smem:[#allocation0]]
  $region57: #{merge2.1} parent=0
    _
  %s8 = ssub.s32 1, %s6
  %s9 = scalar_select 0, %s8, %s6
  $region1: #{merge2.1} parent=0
    #allocation2 [shape = 'u8[512]{0}', space=smem, size = 0x200, scoped, tag = 'input window, operand 0, single buffered']
    #allocation3 [shape = 's32[2]{0}', space=sflag, size = 0x8, scoped, tag = 'scoped memory for merge2.1']
    %10 = vsyncpa [#allocation3], 0
    loop: start=0, step=1, limit=4
    $region2: #{merge2.1} parent=1 // loop_pre_header
      _
    $region3: #{merge2.1} parent=1 // loop_header
      %s12 = sphi 0, %s16
      %p13 = scmp.ge.s32.totalorder %s12, 4
      %s19 = sphi 0, %s31
      %s20 = sphi 0, %s27
      %s21 = sphi 0, %s19
      %s22 = sphi 0, %s20
      %s23 = sphi 0, %s21
      %s24 = sphi 0, %s22
      %s32 = sphi 0, %s32
      %s34 = sphi 0, %s32
      %s35 = sphi 0, %s34
      %s49 = sphi 0, %s35
      %s57 = sphi 0, %s59
      %s60 = sphi 0, %s57
      %s61 = sphi 0, %s60
      %s77 = sphi 0, %s61
      %s85 = sphi 0, %s87
      %s88 = sphi 0, %s85
      %s89 = sphi 0, %s88
      %s105 = sphi 0, %s89
      %s113 = sphi 0, %s115
      %s116 = sphi 0, %s113
      %s117 = sphi 0, %s116
      %s133 = sphi 0, %s117
      %s141 = sphi 0, %s143
      %s144 = sphi 0, %s141
      %s145 = sphi 0, %s144
      %s161 = sphi 0, %s145
      %s169 = sphi 0, %s171
      %s172 = sphi 0, %s169
      %s173 = sphi 0, %s172
      %s189 = sphi 0, %s173
    $region4: #{merge2.1} parent=1 // loop_header_branch
      %15 = sbr.rel (%p13) target = $region8
    $region5: #{merge2.1} parent=1 // loop_body
      %s17 = ssub.s32 %s12, 1
      %s18 = ssub.s32 %s12, 2
      %s25 = sadd.s32 1, %s20
      %p26 = scmp.ge.s32.totalorder %s25, 1
      %s27 = scalar_select %p26, 0, %s25
      %s28 = sadd.s32 1, %s19
      %s29 = scalar_select %p26, %s28, %s19
      %p30 = scmp.ge.s32.totalorder %s29, 2
      %s31 = scalar_select %p30, 0, %s29
      %s33 = sadd.s32 %s32, 1
      %p36 = scmp.eq.s32.totalorder %s12, 1
      %p37 = scmp.ne.s32.totalorder %s32, %s34
      %p38 = scmp.eq.s32.totalorder %s12, 0
      %p39 = por %p37, %p38
      %p40 = scmp.ne.s32.totalorder %s32, %s34
      %p41 = scmp.eq.s32.totalorder %s17, 1
      %p42 = por %p40, %p41
      %p43 = scmp.ne.s32.totalorder %s34, %s35
      %p44 = scmp.eq.s32.totalorder %s17, 0
      %p45 = por %p43, %p44
      %p46 = scmp.ne.s32.totalorder %s34, %s35
      %p47 = scmp.eq.s32.totalorder %s18, 1
      %p48 = por %p46, %p47
      %p50 = scmp.ne.s32.totalorder %s35, %s49
      %p51 = scmp.eq.s32.totalorder %s18, 0
      %p52 = por %p50, %p51
      %s53 = ssub.s32 %s19, %s31
      %s54 = ssub.s32 %s20, %s27
      %s55 = sor.u32 %s53, %s54
      %p56 = scmp.eq.s32.totalorder %s55, 0
      %s58 = sadd.s32 %s57, 1
      %s59 = scalar_select %p56, %s57, %s58
      %p62 = pneg %p56
      %p63 = scmp.eq.s32.totalorder %s12, 1
      %p64 = por %p62, %p63
      %p65 = scmp.ne.s32.totalorder %s57, %s60
      %p66 = scmp.eq.s32.totalorder %s12, 0
      %p67 = por %p65, %p66
      %p68 = scmp.ne.s32.totalorder %s57, %s60
      %p69 = scmp.eq.s32.totalorder %s17, 1
      %p70 = por %p68, %p69
      %p71 = scmp.ne.s32.totalorder %s60, %s61
      %p72 = scmp.eq.s32.totalorder %s17, 0
      %p73 = por %p71, %p72
      %p74 = scmp.ne.s32.totalorder %s60, %s61
      %p75 = scmp.eq.s32.totalorder %s18, 1
      %p76 = por %p74, %p75
      %p78 = scmp.ne.s32.totalorder %s61, %s77
      %p79 = scmp.eq.s32.totalorder %s18, 0
      %p80 = por %p78, %p79
      %s81 = ssub.s32 %s19, %s31
      %s82 = ssub.s32 %s20, %s27
      %s83 = sor.u32 %s81, %s82
      %p84 = scmp.eq.s32.totalorder %s83, 0
      %s86 = sadd.s32 %s85, 1
      %s87 = scalar_select %p84, %s85, %s86
      %p90 = pneg %p84
      %p91 = scmp.eq.s32.totalorder %s12, 1
      %p92 = por %p90, %p91
      %p93 = scmp.ne.s32.totalorder %s85, %s88
      %p94 = scmp.eq.s32.totalorder %s12, 0
      %p95 = por %p93, %p94
      %p96 = scmp.ne.s32.totalorder %s85, %s88
      %p97 = scmp.eq.s32.totalorder %s17, 1
      %p98 = por %p96, %p97
      %p99 = scmp.ne.s32.totalorder %s88, %s89
      %p100 = scmp.eq.s32.totalorder %s17, 0
      %p101 = por %p99, %p100
      %p102 = scmp.ne.s32.totalorder %s88, %s89
      %p103 = scmp.eq.s32.totalorder %s18, 1
      %p104 = por %p102, %p103
      %p106 = scmp.ne.s32.totalorder %s89, %s105
      %p107 = scmp.eq.s32.totalorder %s18, 0
      %p108 = por %p106, %p107
      %s109 = ssub.s32 %s19, %s31
      %s110 = ssub.s32 %s20, %s27
      %s111 = sor.u32 %s109, %s110
      %p112 = scmp.eq.s32.totalorder %s111, 0
      %s114 = sadd.s32 %s113, 1
      %s115 = scalar_select %p112, %s113, %s114
      %p118 = pneg %p112
      %p119 = scmp.eq.s32.totalorder %s12, 1
      %p120 = por %p118, %p119
      %p121 = scmp.ne.s32.totalorder %s113, %s116
      %p122 = scmp.eq.s32.totalorder %s12, 0
      %p123 = por %p121, %p122
      %p124 = scmp.ne.s32.totalorder %s113, %s116
      %p125 = scmp.eq.s32.totalorder %s17, 1
      %p126 = por %p124, %p125
      %p127 = scmp.ne.s32.totalorder %s116, %s117
      %p128 = scmp.eq.s32.totalorder %s17, 0
      %p129 = por %p127, %p128
      %p130 = scmp.ne.s32.totalorder %s116, %s117
      %p131 = scmp.eq.s32.totalorder %s18, 1
      %p132 = por %p130, %p131
      %p134 = scmp.ne.s32.totalorder %s117, %s133
      %p135 = scmp.eq.s32.totalorder %s18, 0
      %p136 = por %p134, %p135
      %s137 = ssub.s32 %s19, %s31
      %s138 = ssub.s32 %s20, %s27
      %s139 = sor.u32 %s137, %s138
      %p140 = scmp.eq.s32.totalorder %s139, 0
      %s142 = sadd.s32 %s141, 1
      %s143 = scalar_select %p140, %s141, %s142
      %p146 = pneg %p140
      %p147 = scmp.eq.s32.totalorder %s12, 1
      %p148 = por %p146, %p147
      %p149 = scmp.ne.s32.totalorder %s141, %s144
      %p150 = scmp.eq.s32.totalorder %s12, 0
      %p151 = por %p149, %p150
      %p152 = scmp.ne.s32.totalorder %s141, %s144
      %p153 = scmp.eq.s32.totalorder %s17, 1
      %p154 = por %p152, %p153
      %p155 = scmp.ne.s32.totalorder %s144, %s145
      %p156 = scmp.eq.s32.totalorder %s17, 0
      %p157 = por %p155, %p156
      %p158 = scmp.ne.s32.totalorder %s144, %s145
      %p159 = scmp.eq.s32.totalorder %s18, 1
      %p160 = por %p158, %p159
      %p162 = scmp.ne.s32.totalorder %s145, %s161
      %p163 = scmp.eq.s32.totalorder %s18, 0
      %p164 = por %p162, %p163
      %s165 = ssub.s32 %s19, %s31
      %s166 = ssub.s32 %s20, %s27
      %s167 = sor.u32 %s165, %s166
      %p168 = scmp.eq.s32.totalorder %s167, 0
      %s170 = sadd.s32 %s169, 1
      %s171 = scalar_select %p168, %s169, %s170
      %p174 = pneg %p168
      %p175 = scmp.eq.s32.totalorder %s12, 1
      %p176 = por %p174, %p175
      %p177 = scmp.ne.s32.totalorder %s169, %s172
      %p178 = scmp.eq.s32.totalorder %s12, 0
      %p179 = por %p177, %p178
      %p180 = scmp.ne.s32.totalorder %s169, %s172
      %p181 = scmp.eq.s32.totalorder %s17, 1
      %p182 = por %p180, %p181
      %p183 = scmp.ne.s32.totalorder %s172, %s173
      %p184 = scmp.eq.s32.totalorder %s17, 0
      %p185 = por %p183, %p184
      %p186 = scmp.ne.s32.totalorder %s172, %s173
      %p187 = scmp.eq.s32.totalorder %s18, 1
      %p188 = por %p186, %p187
      %p190 = scmp.ne.s32.totalorder %s173, %s189
      %p191 = scmp.eq.s32.totalorder %s18, 0
      %p192 = por %p190, %p191
      %p193 = scmp.le.s32.totalorder 1, %s12
      %p194 = scmp.lt.s32.totalorder %s12, 3
      %p195 = pnand %p193, %p194
      %p196 = pneg %p195
      // Predicated region
      $region9: #{merge2.1} parent=5 // pred_check
        _
      $region10: #{merge2.1} parent=5 // pred_check_branch
        %198 = sbr.rel (%p195) target = $region12
      $region11: #{merge2.1} parent=5 // pred_region
        %s199 = ssub.s32 %s12, 1
        // Predicated region
        $region13: #{merge2.1} parent=11 // pred_check
          %p200 = pneg %p45
        $region14: #{merge2.1} parent=11 // pred_check_branch
          %202 = sbr.rel (%p200) target = $region16
        $region15: #{merge2.1} parent=11 // pred_region
          %s204 = ssub.s32 16, 16
          %205 = vsyncadd [#allocation3], %s204
          %s207 = sshll.u32 %s0, 4
          %s208 = int_to_ptr.vmem [resolvable:$true] %s207
          %210 = dma.vmem_to_smem %s208, 16, [#allocation2], [#allocation3]
        $region16: #{merge2.1} parent=11 // pred_fallthru
          _
      $region12: #{merge2.1} parent=5 // pred_fallthru
        _
      %p211 = scmp.lt.s32.totalorder %s12, 2
      // Predicated region
      $region17: #{merge2.1} parent=5 // pred_check
        %p212 = pneg %p211
      $region18: #{merge2.1} parent=5 // pred_check_branch
        %214 = sbr.rel (%p212) target = $region20
      $region19: #{merge2.1} parent=5 // pred_region
        // Predicated region
        $region21: #{merge2.1} parent=19 // pred_check
          %p215 = pneg %p67
        $region22: #{merge2.1} parent=19 // pred_check_branch
          %217 = sbr.rel (%p215) target = $region24
        $region23: #{merge2.1} parent=19 // pred_region
          %s218 = smul.u32 2, %s20
          %p219 = scmp.lt.s32.totalorder %s19, 1
          %s220 = scalar_select %p219, %s19, 1
          %p221 = scmp.lt.s32.totalorder %s218, 1
          %s222 = scalar_select %p221, %s218, 1
          %s223 = smul.addr %s220, 2
          %s224 = sadd.s32 %s222, %s223
          %s225 = smul.addr %s224, 4
          %s226 = scalar_lea.vmem %s1, %s225
          %s227 = smul.u32 2, %s20
        $region24: #{merge2.1} parent=19 // pred_fallthru
          _
        // Predicated region
        $region25: #{merge2.1} parent=19 // pred_check
          %p228 = pneg %p95
        $region26: #{merge2.1} parent=19 // pred_check_branch
          %230 = sbr.rel (%p228) target = $region28
        $region27: #{merge2.1} parent=19 // pred_region
          %s231 = smul.u32 2, %s20
          %p232 = scmp.lt.s32.totalorder %s19, 1
          %s233 = scalar_select %p232, %s19, 1
          %p234 = scmp.lt.s32.totalorder %s231, 1
          %s235 = scalar_select %p234, %s231, 1
          %s236 = smul.addr %s233, 2
          %s237 = sadd.s32 %s235, %s236
          %s238 = smul.addr %s237, 4
          %s239 = scalar_lea.vmem %s2, %s238
          %s240 = smul.u32 2, %s20
        $region28: #{merge2.1} parent=19 // pred_fallthru
          _
        // Predicated region
        $region29: #{merge2.1} parent=19 // pred_check
          %p241 = pneg %p123
        $region30: #{merge2.1} parent=19 // pred_check_branch
          %243 = sbr.rel (%p241) target = $region32
        $region31: #{merge2.1} parent=19 // pred_region
          %s244 = smul.u32 2, %s20
          %p245 = scmp.lt.s32.totalorder %s19, 1
          %s246 = scalar_select %p245, %s19, 1
          %p247 = scmp.lt.s32.totalorder %s244, 1
          %s248 = scalar_select %p247, %s244, 1
          %s249 = smul.addr %s246, 2
          %s250 = sadd.s32 %s248, %s249
          %s251 = scalar_lea.vmem %s3, %s250
          %s252 = smul.u32 2, %s20
        $region32: #{merge2.1} parent=19 // pred_fallthru
          _
        // Predicated region
        $region33: #{merge2.1} parent=19 // pred_check
          %p253 = pneg %p151
        $region34: #{merge2.1} parent=19 // pred_check_branch
          %255 = sbr.rel (%p253) target = $region36
        $region35: #{merge2.1} parent=19 // pred_region
          %s256 = smul.u32 2, %s20
          %p257 = scmp.lt.s32.totalorder %s19, 1
          %s258 = scalar_select %p257, %s19, 1
          %p259 = scmp.lt.s32.totalorder %s256, 1
          %s260 = scalar_select %p259, %s256, 1
          %s261 = smul.addr %s258, 2
          %s262 = sadd.s32 %s260, %s261
          %s263 = scalar_lea.vmem %s4, %s262
          %s264 = smul.u32 2, %s20
        $region36: #{merge2.1} parent=19 // pred_fallthru
          _
      $region20: #{merge2.1} parent=5 // pred_fallthru
        _
      %p265 = scmp.le.s32.totalorder 1, %s12
      %p266 = scmp.lt.s32.totalorder %s12, 3
      %p267 = pnand %p265, %p266
      %p268 = pneg %p267
      // Predicated region
      $region37: #{merge2.1} parent=5 // pred_check
        _
      $region38: #{merge2.1} parent=5 // pred_check_branch
        %270 = sbr.rel (%p267) target = $region40
      $region39: #{merge2.1} parent=5 // pred_region
        %s271 = ssub.s32 %s12, 1
        // Predicated region
        $region41: #{merge2.1} parent=39 // pred_check
          %p272 = pneg %p45
        $region42: #{merge2.1} parent=39 // pred_check_branch
          %274 = sbr.rel (%p272) target = $region44
        $region43: #{merge2.1} parent=39 // pred_region
          %275 = dma.done [#allocation3], 16
        $region44: #{merge2.1} parent=39 // pred_fallthru
          _
        %276 = sfence
        %p277 = pneg %p45
        %p278 = pneg %p42
        %s279 = smul.u32 2, %s22
        %p280 = scmp.lt.s32.totalorder %s21, 1
        %s281 = scalar_select %p280, %s21, 1
        %p282 = scmp.lt.s32.totalorder %s279, 1
        %s283 = scalar_select %p282, %s279, 1
        %s284 = smul.addr %s281, 2
        %s285 = sadd.s32 %s283, %s284
        %s286 = smul.addr %s285, 4
        %s287 = scalar_lea.vmem %s1, %s286
        %p288 = pneg %p73
        %p289 = pneg %p70
        %s290 = smul.u32 2, %s22
        %p291 = scmp.lt.s32.totalorder %s21, 1
        %s292 = scalar_select %p291, %s21, 1
        %p293 = scmp.lt.s32.totalorder %s290, 1
        %s294 = scalar_select %p293, %s290, 1
        %s295 = smul.addr %s292, 2
        %s296 = sadd.s32 %s294, %s295
        %s297 = smul.addr %s296, 4
        %s298 = scalar_lea.vmem %s2, %s297
        %p299 = pneg %p101
        %p300 = pneg %p98
        %s301 = smul.u32 2, %s22
        %p302 = scmp.lt.s32.totalorder %s21, 1
        %s303 = scalar_select %p302, %s21, 1
        %p304 = scmp.lt.s32.totalorder %s301, 1
        %s305 = scalar_select %p304, %s301, 1
        %s306 = smul.addr %s303, 2
        %s307 = sadd.s32 %s305, %s306
        %s308 = scalar_lea.vmem %s3, %s307
        %p309 = pneg %p129
        %p310 = pneg %p126
        %s311 = smul.u32 2, %s22
        %p312 = scmp.lt.s32.totalorder %s21, 1
        %s313 = scalar_select %p312, %s21, 1
        %p314 = scmp.lt.s32.totalorder %s311, 1
        %s315 = scalar_select %p314, %s311, 1
        %s316 = smul.addr %s313, 2
        %s317 = sadd.s32 %s315, %s316
        %s318 = scalar_lea.vmem %s4, %s317
        %p319 = pneg %p157
        %p320 = pneg %p154
        %p321 = pneg %p185
        %p322 = pneg %p182
        %s323 = smul.u32 2, %s22
        %p324 = scmp.lt.s32.totalorder %s21, 1
        %s325 = scalar_select %p324, %s21, 1
        %p326 = scmp.lt.s32.totalorder %s323, 1
        %s327 = scalar_select %p326, %s323, 1
        %s328 = smul.addr %s325, 2
        %s329 = sadd.s32 %s327, %s328
        %s330 = smul.addr %s329, 4
        %s331 = scalar_lea.vmem %s5, %s330
        %s332 = smul.u32 2, %s22
        %p333 = scmp.lt.s32.totalorder %s21, 1
        %s334 = scalar_select %p333, %s21, 1
        %p335 = scmp.lt.s32.totalorder %s332, 1
        %s336 = scalar_select %p335, %s332, 1
        %s337 = smul.addr %s334, 2
        %s338 = sadd.s32 %s336, %s337
        %s339 = smul.addr %s338, 4
        %s340 = scalar_lea.vmem %s1, %s339
        %s341 = smul.u32 2, %s22
        %s342 = smul.u32 2, %s22
        %p343 = scmp.lt.s32.totalorder %s21, 1
        %s344 = scalar_select %p343, %s21, 1
        %p345 = scmp.lt.s32.totalorder %s342, 1
        %s346 = scalar_select %p345, %s342, 1
        %s347 = smul.addr %s344, 2
        %s348 = sadd.s32 %s346, %s347
        %s349 = smul.addr %s348, 4
        %s350 = scalar_lea.vmem %s2, %s349
        %s351 = smul.u32 2, %s22
        %s352 = smul.u32 2, %s22
        %p353 = scmp.lt.s32.totalorder %s21, 1
        %s354 = scalar_select %p353, %s21, 1
        %p355 = scmp.lt.s32.totalorder %s352, 1
        %s356 = scalar_select %p355, %s352, 1
        %s357 = smul.addr %s354, 2
        %s358 = sadd.s32 %s356, %s357
        %s359 = scalar_lea.vmem %s3, %s358
        %s360 = smul.u32 2, %s22
        %s361 = smul.u32 2, %s22
        %p362 = scmp.lt.s32.totalorder %s21, 1
        %s363 = scalar_select %p362, %s21, 1
        %p364 = scmp.lt.s32.totalorder %s361, 1
        %s365 = scalar_select %p364, %s361, 1
        %s366 = smul.addr %s363, 2
        %s367 = sadd.s32 %s365, %s366
        %s368 = scalar_lea.vmem %s4, %s367
        %s369 = smul.u32 2, %s22
        %s370 = smul.u32 2, %s22
        %p371 = scmp.lt.s32.totalorder %s21, 1
        %s372 = scalar_select %p371, %s21, 1
        %p373 = scmp.lt.s32.totalorder %s370, 1
        %s374 = scalar_select %p373, %s370, 1
        %s375 = smul.addr %s372, 2
        %s376 = sadd.s32 %s374, %s375
        %s377 = smul.addr %s376, 4
        %s378 = scalar_lea.vmem %s5, %s377
        %s379 = smul.u32 2, %s22
        %s380 = sld [smem:[#allocation2]]
        %s381 = sld [smem:[#allocation2 + $0x1]]
        %v382 = vld [vmem:[%s359] sm:$0x3]
        %v383 = vxor.u32 %v382, 2147483648
        %v384 = vmul.f32 %v383, 1.442695
        %v385 = vpow.pop %v384
        %v386 = vadd.f32 %v385, 1.0
        %v387 = vrcp.pop %v386
        %v388 = vmul.f32 1.0, %v387
        %v389 = vstv %s380
        %v390 = vmul.f32 %v388, %v389
        %v391 = vadd.f32 %v390, 1.0
        %v392 = vld [vmem:[%s368] sm:$0x3]
        %v393 = vstv %s381
        %v394 = vmul.f32 %v392, %v393
        %v395 = vadd.f32 %v391, %v394
        %v396 = vld [vmem:[%s340] sm:$0xff]
        %v397 = vld [vmem:[%s350] sm:$0xff]
        %v399 = vlaneseq
        %v400 = vshrl.u32 %v399, 7
        %v401 = vsub.s32 0, %v400
        %v402 = vrot.slane %v395, %v401
        %v403 = vlaneseq
        %v404 = vshrl.u32 %v403, 7
        %v405 = vsub.s32 1, %v404
        %v406 = vrot.slane %v395, %v405
        %v407 = vcombine.low %v402, %v406
        %v409 = vmul.f32 %v397, %v407
        %v410 = vadd.f32 %v396, %v409
        %411 = vst [vmem:[%s378] sm:$0xff] %v410
        %s412 = smul.u32 2, %s22
        %p413 = scmp.lt.s32.totalorder %s21, 1
        %s414 = scalar_select %p413, %s21, 1
        %p415 = scmp.lt.s32.totalorder %s412, 1
        %s416 = scalar_select %p415, %s412, 1
        %s417 = smul.addr %s414, 2
        %s418 = sadd.s32 %s416, %s417
        %s419 = smul.addr %s418, 4
        %s420 = scalar_lea.vmem %s5, %s419
        // Predicated region
        $region45: #{merge2.1} parent=39 // pred_check
          %p421 = pneg %p182
        $region46: #{merge2.1} parent=39 // pred_check_branch
          %423 = sbr.rel (%p421) target = $region48
        $region47: #{merge2.1} parent=39 // pred_region
          %s424 = smul.u32 2, %s22
        $region48: #{merge2.1} parent=39 // pred_fallthru
          _
      $region40: #{merge2.1} parent=5 // pred_fallthru
        _
      %p425 = scmp.le.s32.totalorder 2, %s12
      // Predicated region
      $region49: #{merge2.1} parent=5 // pred_check
        %p426 = pneg %p425
      $region50: #{merge2.1} parent=5 // pred_check_branch
        %428 = sbr.rel (%p426) target = $region52
      $region51: #{merge2.1} parent=5 // pred_region
        %s429 = ssub.s32 %s12, 2
        // Predicated region
        $region53: #{merge2.1} parent=51 // pred_check
          %p430 = pneg %p188
        $region54: #{merge2.1} parent=51 // pred_check_branch
          %432 = sbr.rel (%p430) target = $region56
        $region55: #{merge2.1} parent=51 // pred_region
          %s433 = smul.u32 2, %s24
          %p434 = scmp.lt.s32.totalorder %s23, 1
          %s435 = scalar_select %p434, %s23, 1
          %p436 = scmp.lt.s32.totalorder %s433, 1
          %s437 = scalar_select %p436, %s433, 1
          %s438 = smul.addr %s435, 2
          %s439 = sadd.s32 %s437, %s438
          %s440 = smul.addr %s439, 4
          %s441 = scalar_lea.vmem %s5, %s440
        $region56: #{merge2.1} parent=51 // pred_fallthru
          _
      $region52: #{merge2.1} parent=5 // pred_fallthru
        _
    $region6: #{merge2.1} parent=1 // loop_footer
      %s16 = sadd.s32 1, %s12
    $region7: #{merge2.1} parent=1 // loop_footer_branch
      %11 = sbr.rel target = $region3
    $region8: #{merge2.1} parent=1 // loop_exit
      _
    %442 = vsyncpa [#allocation3], 1
    %s443 = scalar_lea.sflag [#allocation3], 1
    %444 = vsyncpa %s443, 1

</llo_original>
